<compile_context>
chip_gen: v5e
topology: v5e:2x2
jax: 0.10.0
libtpu: 0.0.40
codegen_flags: <defaults>
</compile_context>

<pallas_src>
import functools

import jax
import jax.numpy as jnp
from jax.experimental import pallas as pl
from jax.experimental.pallas import tpu as pltpu

# ----- "param" configuration (synthetic) -----------------------------------
DIM = 2        # param.dim
N_HIDDEN = 32  # param.n_hidden
N_LAYER = 3    # param.n_layer
N_DATA = 1024  # batch of positions (many rows per call -> overhead amortized)


def _num_parallel_cores():
    """Best-effort TensorCores-per-JAX-device (dual-TC v7x, megacore v4/v5p).

    Only influences the grid split (performance); a wrong guess stays correct.
    """
    try:
        kind = str(jax.devices()[0].device_kind).lower()
    except Exception:  # non-TPU / unknown backend: fall back to one block
        return 1
    if ("v7" in kind) or ("7x" in kind) or ("v4" in kind) or ("v5p" in kind):
        return 2
    return 1


def _fnn_kernel(n_layer, dim, inv_ref, x_ref, *wb_out):
    """Fused MLP forward on one (dim, TM) column block.

    inv_ref : SMEM (1, 1) f32   -- 1/correct (runtime scalar, no recompiles)
    x_ref   : VMEM (dim, TM)    -- input positions, transposed layout
    wb_out  : (W1t, b1, W2t, b2, ..., Wnt, bn, Wot, bo, outT)
              Wit : (out_features, in_features)  -> h_new.T = Wit @ h.T
              bi  : (out_features, 1)
              outT: (dim, TM)
    """
    out_ref = wb_out[-1]
    wb = wb_out[:-1]

    x = x_ref[...]                                   # (dim, TM)

    # ---- layer 1: contraction dim K == dim (tiny, e.g. 2) -> VPU broadcast
    # FMAs instead of an MXU matmul.  Unrolled at trace time.
    w1t = wb[0][...]                                 # (H, dim)
    b1 = wb[1][...]                                  # (H, 1)
    acc = w1t[:, 0:1] * x[0:1, :]                    # (H,1)*(1,TM) -> (H,TM)
    for k in range(1, dim):
        acc = acc + w1t[:, k:k + 1] * x[k:k + 1, :]
    h = jnp.maximum(acc + b1, 0.0)                   # (H, TM)

    # ---- hidden layers 2..n_layer: (H, H) @ (H, TM) on the MXU.
    # Python loop unrolls at trace time (short fixed trip count).
    for i in range(1, n_layer):
        wt = wb[2 * i][...]                          # (H, H)
        b = wb[2 * i + 1][...]                       # (H, 1)
        h = jnp.maximum(
            jnp.dot(wt, h, preferred_element_type=jnp.float32) + b, 0.0)

    # ---- output layer: (dim, H) @ (H, TM) -> (dim, TM); lane-dense store.
    wot = wb[2 * n_layer][...]                       # (dim, H)
    bo = wb[2 * n_layer + 1][...]                    # (dim, 1)
    y = jnp.dot(wot, h, preferred_element_type=jnp.float32) + bo
    # NOTE: y * (1/correct) differs from y / correct by at most ~1 ULP.
    out_ref[...] = (y * inv_ref[0, 0]).astype(out_ref.dtype)


@functools.partial(jax.jit, static_argnames=("transposed_out",))
def fnn_forward(s, params, correct=1.0, transposed_out=False):
    """s: (n_data, dim) f32. params: list of (W, b) with W in (in, out) layout.

    Matches FNN.forward semantics: y = relu(s @ W + b) per hidden layer, then
    (h @ Wo + bo) / correct (PyTorch nn.Linear stores W transposed; here W is
    (in, out) so s @ W is the same math).

    Returns (n_data, dim), or (dim, n_data) if transposed_out=True (skips the
    trailing layout transpose for consumers that accept that layout).
    """
    n_data, dim = s.shape
    n_layer = len(params) - 1                        # last pair is the output layer

    # Runtime scalar -> SMEM. Changing `correct` does not recompile the kernel.
    inv_c = jnp.asarray(1.0 / correct, jnp.float32).reshape(1, 1)

    # Transposed (features, batch) layout: long batch axis on the 128-lane axis.
    # These tiny layout ops fuse into the jitted program around the kernel.
    flat = []
    for w, b in params:
        flat.append(jnp.asarray(w).T)                # (out, in): h_new.T = W.T @ h.T
        flat.append(jnp.asarray(b).reshape(-1, 1))   # (out, 1) column bias

    # Generation-aware block split: 1 block (no grid) on single-TC chips,
    # 2 parallel blocks on dual-TC / megacore chips.
    n_blocks = _num_parallel_cores()
    if n_data < 256 or n_data % n_blocks != 0:
        n_blocks = 1
    tm = pl.cdiv(n_data, n_blocks * 128) * 128       # lane-aligned per-block width
    n_pad = tm * n_blocks

    sT = s.T                                         # (dim, n_data)
    if n_pad != n_data:                              # only pad when not lane-aligned
        sT = jnp.pad(sT, ((0, 0), (0, n_pad - n_data)))

    kernel = functools.partial(_fnn_kernel, n_layer, dim)
    out_shape = jax.ShapeDtypeStruct((dim, n_pad), jnp.float32)
    smem_spec = pl.BlockSpec(memory_space=pltpu.MemorySpace.SMEM)

    if n_blocks == 1:
        # Single block, no grid: no pipeline machinery, no double-buffered
        # copies of the (never-changing) weights, no per-step overhead.
        vspecs = [pl.BlockSpec(a.shape, lambda: (0, 0)) for a in [sT] + flat]
        out_spec = pl.BlockSpec((dim, n_pad), lambda: (0, 0))
        out_t = pl.pallas_call(
            kernel,
            out_shape=out_shape,
            in_specs=[smem_spec] + vspecs,
            out_specs=out_spec,
        )(inv_c, sT, *flat)
    else:
        # Two parallel blocks: one per TensorCore (v7x / megacore).  Constant
        # index_maps keep the ~10 KiB of weights VMEM-resident (no re-DMA
        # across the two steps).
        x_spec = pl.BlockSpec((dim, tm), lambda i: (0, i))
        wb_specs = [pl.BlockSpec(a.shape, lambda i: (0, 0)) for a in flat]
        out_spec = pl.BlockSpec((dim, tm), lambda i: (0, i))
        out_t = pl.pallas_call(
            kernel,
            out_shape=out_shape,
            grid=(n_blocks,),
            in_specs=[smem_spec, x_spec] + wb_specs,
            out_specs=out_spec,
            compiler_params=pltpu.CompilerParams(
                dimension_semantics=("parallel",),
            ),
        )(inv_c, sT, *flat)

    out_t = out_t[:, :n_data]
    if transposed_out:
        return out_t
    return out_t.T


def init_params(key, dim, n_hidden, n_layer):
    """Deterministic init mimicking PyTorch Linear default: U(-1/sqrt(fan_in), 1/sqrt(fan_in))."""
    sizes = [(dim, n_hidden)] + [(n_hidden, n_hidden)] * (n_layer - 1) + [(n_hidden, dim)]
    params = []
    for (fan_in, fan_out) in sizes:
        key, kw, kb = jax.random.split(key, 3)
        bound = 1.0 / jnp.sqrt(fan_in)
        w = jax.random.uniform(kw, (fan_in, fan_out), jnp.float32, -bound, bound)
        b = jax.random.uniform(kb, (fan_out,), jnp.float32, -bound, bound)
        params.append((w, b))
    return params


def fnn_reference(s, params, correct=1.0):
    """Pure-JAX reference (full-precision matmuls) for correctness checking."""
    hi = jax.lax.Precision.HIGHEST
    h = s
    for w, b in params[:-1]:
        h = jnp.maximum(jnp.dot(h, w, precision=hi) + b, 0.0)
    w, b = params[-1]
    return (jnp.dot(h, w, precision=hi) + b) / correct


if __name__ == "__main__":
    key = jax.random.PRNGKey(0)
    k_in, k_par = jax.random.split(key)

    s = jax.random.normal(k_in, (N_DATA, DIM), jnp.float32)
    params = init_params(k_par, DIM, N_HIDDEN, N_LAYER)

    out = fnn_forward(s, params, 1.0)
    out = jax.block_until_ready(out)

    ref = fnn_reference(s, params, 1.0)
    assert out.shape == (N_DATA, DIM)
    max_err = float(jnp.max(jnp.abs(out - ref)))
    assert max_err < 1e-4, f"mismatch vs reference: max abs err {max_err}"

    print("KERNEL_OK")
</pallas_src>

<mosaic_0001>
module attributes {stable_mosaic.version = 11 : i64} {
  func.func @_fnn_kernel(%arg0: memref<1x1xf32, #tpu.memory_space<smem>>, %arg1: memref<2x1024xf32, #tpu.memory_space<vmem>>, %arg2: memref<32x2xf32, #tpu.memory_space<vmem>>, %arg3: memref<32x1xf32, #tpu.memory_space<vmem>>, %arg4: memref<32x32xf32, #tpu.memory_space<vmem>>, %arg5: memref<32x1xf32, #tpu.memory_space<vmem>>, %arg6: memref<32x32xf32, #tpu.memory_space<vmem>>, %arg7: memref<32x1xf32, #tpu.memory_space<vmem>>, %arg8: memref<2x32xf32, #tpu.memory_space<vmem>>, %arg9: memref<2x1xf32, #tpu.memory_space<vmem>>, %arg10: memref<2x1024xf32, #tpu.memory_space<vmem>>) attributes {dimension_semantics = [], scalar_prefetch = 0 : i64, scratch_operands = 0 : i64, tpu.core_type = #tpu.core_type<tc>} {
    %c0 = arith.constant 0 : index
    %c0_0 = arith.constant 0 : index
    %0 = vector.load %arg1[%c0, %c0_0] : memref<2x1024xf32, #tpu.memory_space<vmem>>, vector<2x1024xf32>
    %c0_1 = arith.constant 0 : index
    %c0_2 = arith.constant 0 : index
    %1 = vector.load %arg2[%c0_1, %c0_2] : memref<32x2xf32, #tpu.memory_space<vmem>>, vector<32x2xf32>
    %c0_3 = arith.constant 0 : index
    %c0_4 = arith.constant 0 : index
    %2 = vector.load %arg3[%c0_3, %c0_4] : memref<32x1xf32, #tpu.memory_space<vmem>>, vector<32x1xf32>
    %3 = vector.extract_strided_slice %1 {offsets = [0, 0], sizes = [32, 1], strides = [1, 1]} : vector<32x2xf32> to vector<32x1xf32>
    %4 = vector.extract_strided_slice %0 {offsets = [0, 0], sizes = [1, 1024], strides = [1, 1]} : vector<2x1024xf32> to vector<1x1024xf32>
    %5 = vector.broadcast %3 : vector<32x1xf32> to vector<32x1024xf32>
    %6 = vector.broadcast %4 : vector<1x1024xf32> to vector<32x1024xf32>
    %7 = arith.mulf %5, %6 : vector<32x1024xf32>
    %8 = vector.extract_strided_slice %1 {offsets = [0, 1], sizes = [32, 1], strides = [1, 1]} : vector<32x2xf32> to vector<32x1xf32>
    %9 = vector.extract_strided_slice %0 {offsets = [1, 0], sizes = [1, 1024], strides = [1, 1]} : vector<2x1024xf32> to vector<1x1024xf32>
    %10 = vector.broadcast %8 : vector<32x1xf32> to vector<32x1024xf32>
    %11 = vector.broadcast %9 : vector<1x1024xf32> to vector<32x1024xf32>
    %12 = arith.mulf %10, %11 : vector<32x1024xf32>
    %13 = arith.addf %7, %12 : vector<32x1024xf32>
    %14 = vector.broadcast %2 : vector<32x1xf32> to vector<32x1024xf32>
    %15 = arith.addf %13, %14 : vector<32x1024xf32>
    %cst = arith.constant 0.000000e+00 : f32
    %16 = vector.broadcast %cst : f32 to vector<32x1024xf32>
    %17 = arith.maximumf %15, %16 : vector<32x1024xf32>
    %c0_5 = arith.constant 0 : index
    %c0_6 = arith.constant 0 : index
    %18 = vector.load %arg4[%c0_5, %c0_6] : memref<32x32xf32, #tpu.memory_space<vmem>>, vector<32x32xf32>
    %c0_7 = arith.constant 0 : index
    %c0_8 = arith.constant 0 : index
    %19 = vector.load %arg5[%c0_7, %c0_8] : memref<32x1xf32, #tpu.memory_space<vmem>>, vector<32x1xf32>
    %cst_9 = arith.constant dense<0.000000e+00> : vector<32x1024xf32>
    %20 = tpu.matmul %18, %17, %cst_9 {dimension_numbers = #tpu.dot_dimension_numbers<[1], [0], [0], [1], [0, 0, 1, 1], [], []>} : vector<32x32xf32>, vector<32x1024xf32>, vector<32x1024xf32> -> vector<32x1024xf32>
    %21 = vector.broadcast %19 : vector<32x1xf32> to vector<32x1024xf32>
    %22 = arith.addf %20, %21 : vector<32x1024xf32>
    %cst_10 = arith.constant 0.000000e+00 : f32
    %23 = vector.broadcast %cst_10 : f32 to vector<32x1024xf32>
    %24 = arith.maximumf %22, %23 : vector<32x1024xf32>
    %c0_11 = arith.constant 0 : index
    %c0_12 = arith.constant 0 : index
    %25 = vector.load %arg6[%c0_11, %c0_12] : memref<32x32xf32, #tpu.memory_space<vmem>>, vector<32x32xf32>
    %c0_13 = arith.constant 0 : index
    %c0_14 = arith.constant 0 : index
    %26 = vector.load %arg7[%c0_13, %c0_14] : memref<32x1xf32, #tpu.memory_space<vmem>>, vector<32x1xf32>
    %cst_15 = arith.constant dense<0.000000e+00> : vector<32x1024xf32>
    %27 = tpu.matmul %25, %24, %cst_15 {dimension_numbers = #tpu.dot_dimension_numbers<[1], [0], [0], [1], [0, 0, 1, 1], [], []>} : vector<32x32xf32>, vector<32x1024xf32>, vector<32x1024xf32> -> vector<32x1024xf32>
    %28 = vector.broadcast %26 : vector<32x1xf32> to vector<32x1024xf32>
    %29 = arith.addf %27, %28 : vector<32x1024xf32>
    %cst_16 = arith.constant 0.000000e+00 : f32
    %30 = vector.broadcast %cst_16 : f32 to vector<32x1024xf32>
    %31 = arith.maximumf %29, %30 : vector<32x1024xf32>
    %c0_17 = arith.constant 0 : index
    %c0_18 = arith.constant 0 : index
    %32 = vector.load %arg8[%c0_17, %c0_18] : memref<2x32xf32, #tpu.memory_space<vmem>>, vector<2x32xf32>
    %c0_19 = arith.constant 0 : index
    %c0_20 = arith.constant 0 : index
    %33 = vector.load %arg9[%c0_19, %c0_20] : memref<2x1xf32, #tpu.memory_space<vmem>>, vector<2x1xf32>
    %cst_21 = arith.constant dense<0.000000e+00> : vector<2x1024xf32>
    %34 = tpu.matmul %32, %31, %cst_21 {dimension_numbers = #tpu.dot_dimension_numbers<[1], [0], [0], [1], [0, 0, 1, 1], [], []>} : vector<2x32xf32>, vector<32x1024xf32>, vector<2x1024xf32> -> vector<2x1024xf32>
    %35 = vector.broadcast %33 : vector<2x1xf32> to vector<2x1024xf32>
    %36 = arith.addf %34, %35 : vector<2x1024xf32>
    %c0_22 = arith.constant 0 : index
    %c0_23 = arith.constant 0 : index
    %37 = memref.load %arg0[%c0_22, %c0_23] : memref<1x1xf32, #tpu.memory_space<smem>>
    %38 = vector.broadcast %37 : f32 to vector<2x1024xf32>
    %39 = arith.mulf %36, %38 : vector<2x1024xf32>
    %c0_24 = arith.constant 0 : index
    %c0_25 = arith.constant 0 : index
    %40 = vector.load %arg10[%c0_24, %c0_25] : memref<2x1024xf32, #tpu.memory_space<vmem>>, vector<2x1024xf32>
    tpu.vector_store %arg10[%c0_24, %c0_25], %39 {strides = array<i32>} : memref<2x1024xf32, #tpu.memory_space<vmem>>, vector<2x1024xf32>,
    return
  }
}

</mosaic_0001>

<llo_original>
// kernel: fnn_forward.1
$region0: #{fnn_forward.1}
  #allocation0 [shape = 'u32[]', space=smem, size = 0x4, offset = 0x4, fixed_abs, tag = 'smem constant byte address 0x4 - core index']
  #allocation1 [shape = 'u32[72,128]{1,0:T(1,128)}', space=vmem, size = 0x9000, scoped, tag = 'internal scratch']
  #allocation2 [shape = 'f32[1,1]{1,0:T(1,128)S(6)}', space=smem, size = 0x200, scoped, tag = 'scoped memory for fnn_forward.1']
  %s0 = inlined_call_operand.<no memory space> [shape: f32[1,1], index: 0, kind: input, shape index: {}]
  %s1 = inlined_call_operand.vmem [shape: f32[2,1024], index: 1, kind: input, shape index: {}]
  %s2 = inlined_call_operand.vmem [shape: f32[32,2], index: 2, kind: input, shape index: {}]
  %s3 = inlined_call_operand.vmem [shape: f32[32,1], index: 3, kind: input, shape index: {}]
  %s4 = inlined_call_operand.vmem [shape: f32[32,32], index: 4, kind: input, shape index: {}]
  %s5 = inlined_call_operand.vmem [shape: f32[32,1], index: 5, kind: input, shape index: {}]
  %s6 = inlined_call_operand.vmem [shape: f32[32,32], index: 6, kind: input, shape index: {}]
  %s7 = inlined_call_operand.vmem [shape: f32[32,1], index: 7, kind: input, shape index: {}]
  %s8 = inlined_call_operand.vmem [shape: f32[2,32], index: 8, kind: input, shape index: {}]
  %s9 = inlined_call_operand.vmem [shape: f32[2,1], index: 9, kind: input, shape index: {}]
  %s10 = inlined_call_operand.hbm [shape: f32[2,1024], index: 10, kind: output, shape index: {}]
  %s11 = sld [smem:[#allocation0]]
  $region50: #{fnn_forward.1} parent=0
    _
  %s13 = ssub.s32 1, %s11
  %s14 = scalar_select 0, %s13, %s11
  %15 = sst [smem:[#allocation2]] %s0
  $region1: #{fnn_forward.1} parent=0
    #allocation3 [shape = 'u8[8192]{0}', space=vmem, size = 0x2000, scoped, tag = 'output window, operand 0, single buffered']
    #allocation4 [shape = 's32[1]{0}', space=sflag, size = 0x4, scoped, tag = 'scoped memory for fnn_forward.1']
    %16 = vsyncpa [#allocation4], 0
    // Predicated region
    $region2: #{fnn_forward.1} parent=1 // pred_check
      _
    $region3: #{fnn_forward.1} parent=1 // pred_check_branch
      %18 = sbr.rel (0) target = $region5
    $region4: #{fnn_forward.1} parent=1 // pred_region
      _
    $region5: #{fnn_forward.1} parent=1 // pred_fallthru
      _
    // Predicated region
    $region6: #{fnn_forward.1} parent=1 // pred_check
      _
    $region7: #{fnn_forward.1} parent=1 // pred_check_branch
      %20 = sbr.rel (0) target = $region9
    $region8: #{fnn_forward.1} parent=1 // pred_region
      _
    $region9: #{fnn_forward.1} parent=1 // pred_fallthru
      _
    // Predicated region
    $region10: #{fnn_forward.1} parent=1 // pred_check
      _
    $region11: #{fnn_forward.1} parent=1 // pred_check_branch
      %22 = sbr.rel (0) target = $region13
    $region12: #{fnn_forward.1} parent=1 // pred_region
      _
    $region13: #{fnn_forward.1} parent=1 // pred_fallthru
      _
    // Predicated region
    $region14: #{fnn_forward.1} parent=1 // pred_check
      _
    $region15: #{fnn_forward.1} parent=1 // pred_check_branch
      %24 = sbr.rel (0) target = $region17
    $region16: #{fnn_forward.1} parent=1 // pred_region
      _
    $region17: #{fnn_forward.1} parent=1 // pred_fallthru
      _
    // Predicated region
    $region18: #{fnn_forward.1} parent=1 // pred_check
      _
    $region19: #{fnn_forward.1} parent=1 // pred_check_branch
      %26 = sbr.rel (0) target = $region21
    $region20: #{fnn_forward.1} parent=1 // pred_region
      _
    $region21: #{fnn_forward.1} parent=1 // pred_fallthru
      _
    // Predicated region
    $region22: #{fnn_forward.1} parent=1 // pred_check
      _
    $region23: #{fnn_forward.1} parent=1 // pred_check_branch
      %28 = sbr.rel (0) target = $region25
    $region24: #{fnn_forward.1} parent=1 // pred_region
      _
    $region25: #{fnn_forward.1} parent=1 // pred_fallthru
      _
    // Predicated region
    $region26: #{fnn_forward.1} parent=1 // pred_check
      _
    $region27: #{fnn_forward.1} parent=1 // pred_check_branch
      %30 = sbr.rel (0) target = $region29
    $region28: #{fnn_forward.1} parent=1 // pred_region
      _
    $region29: #{fnn_forward.1} parent=1 // pred_fallthru
      _
    // Predicated region
    $region30: #{fnn_forward.1} parent=1 // pred_check
      _
    $region31: #{fnn_forward.1} parent=1 // pred_check_branch
      %32 = sbr.rel (0) target = $region33
    $region32: #{fnn_forward.1} parent=1 // pred_region
      _
    $region33: #{fnn_forward.1} parent=1 // pred_fallthru
      _
    // Predicated region
    $region34: #{fnn_forward.1} parent=1 // pred_check
      _
    $region35: #{fnn_forward.1} parent=1 // pred_check_branch
      %34 = sbr.rel (0) target = $region37
    $region36: #{fnn_forward.1} parent=1 // pred_region
      _
    $region37: #{fnn_forward.1} parent=1 // pred_fallthru
      _
    // Predicated region
    $region38: #{fnn_forward.1} parent=1 // pred_check
      _
    $region39: #{fnn_forward.1} parent=1 // pred_check_branch
      %36 = sbr.rel (0) target = $region41
    $region40: #{fnn_forward.1} parent=1 // pred_region
      _
    $region41: #{fnn_forward.1} parent=1 // pred_fallthru
      _
    %v37 = vld [vmem:[%s1] sm:$0xff]
    %v38 = vld [vmem:[%s1 + $0x8] sm:$0xff]
    %v39 = vld [vmem:[%s2] sm:$0xff]
    %v40 = vld [vmem:[%s2 + $0x8] sm:$0xff]
    %v41 = vld [vmem:[%s2 + $0x10] sm:$0xff]
    %v42 = vld [vmem:[%s2 + $0x18] sm:$0xff]
    %v43 = vld [vmem:[%s3] sm:$0xff]
    %v44 = vld [vmem:[%s3 + $0x8] sm:$0xff]
    %v45 = vld [vmem:[%s3 + $0x10] sm:$0xff]
    %v46 = vld [vmem:[%s3 + $0x18] sm:$0xff]
    %48 = vset.pattern.permute.xlu0 0
    %49 = vperm.xlu0 %48, %v39
    %v50 = vpop.permute.xlu0 %49
    %53 = vset.pattern.permute.xlu0 0
    %54 = vperm.xlu0 %53, %v40
    %v55 = vpop.permute.xlu0 %54
    %58 = vset.pattern.permute.xlu0 0
    %59 = vperm.xlu0 %58, %v41
    %v60 = vpop.permute.xlu0 %59
    %63 = vset.pattern.permute.xlu0 0
    %64 = vperm.xlu0 %63, %v42
    %v65 = vpop.permute.xlu0 %64
    %v69 = vperm.slane %v37, 0
    %v70 = vperm.slane %v37, 2
    %v71 = vperm.slane %v37, 4
    %v72 = vperm.slane %v37, 6
    %v73 = vperm.slane %v38, 0
    %v74 = vperm.slane %v38, 2
    %v75 = vperm.slane %v38, 4
    %v76 = vperm.slane %v38, 6
    %v85 = vperm.slane %v69, 0
    %v86 = vperm.slane %v70, 0
    %v87 = vperm.slane %v71, 0
    %v88 = vperm.slane %v72, 0
    %v89 = vperm.slane %v73, 0
    %v90 = vperm.slane %v74, 0
    %v91 = vperm.slane %v75, 0
    %v92 = vperm.slane %v76, 0
    %v93 = vmul.f32 %v50, %v85
    %v94 = vmul.f32 %v50, %v86
    %v95 = vmul.f32 %v50, %v87
    %v96 = vmul.f32 %v50, %v88
    %v97 = vmul.f32 %v50, %v89
    %v98 = vmul.f32 %v50, %v90
    %v99 = vmul.f32 %v50, %v91
    %v100 = vmul.f32 %v50, %v92
    %v101 = vmul.f32 %v55, %v85
    %v102 = vmul.f32 %v55, %v86
    %v103 = vmul.f32 %v55, %v87
    %v104 = vmul.f32 %v55, %v88
    %v105 = vmul.f32 %v55, %v89
    %v106 = vmul.f32 %v55, %v90
    %v107 = vmul.f32 %v55, %v91
    %v108 = vmul.f32 %v55, %v92
    %v109 = vmul.f32 %v60, %v85
    %v110 = vmul.f32 %v60, %v86
    %v111 = vmul.f32 %v60, %v87
    %v112 = vmul.f32 %v60, %v88
    %v113 = vmul.f32 %v60, %v89
    %v114 = vmul.f32 %v60, %v90
    %v115 = vmul.f32 %v60, %v91
    %v116 = vmul.f32 %v60, %v92
    %v117 = vmul.f32 %v65, %v85
    %v118 = vmul.f32 %v65, %v86
    %v119 = vmul.f32 %v65, %v87
    %v120 = vmul.f32 %v65, %v88
    %v121 = vmul.f32 %v65, %v89
    %v122 = vmul.f32 %v65, %v90
    %v123 = vmul.f32 %v65, %v91
    %v124 = vmul.f32 %v65, %v92
    %125 = vset.pattern.permute.xlu0 1
    %126 = vperm.xlu0 %125, %v39
    %v127 = vpop.permute.xlu0 %126
    %129 = vset.pattern.permute.xlu0 1
    %130 = vperm.xlu0 %129, %v40
    %v131 = vpop.permute.xlu0 %130
    %133 = vset.pattern.permute.xlu0 1
    %134 = vperm.xlu0 %133, %v41
    %v135 = vpop.permute.xlu0 %134
    %137 = vset.pattern.permute.xlu0 1
    %138 = vperm.xlu0 %137, %v42
    %v139 = vpop.permute.xlu0 %138
    %v141 = vperm.slane %v37, 1
    %v142 = vperm.slane %v37, 3
    %v143 = vperm.slane %v37, 5
    %v144 = vperm.slane %v37, 7
    %v145 = vperm.slane %v38, 1
    %v146 = vperm.slane %v38, 3
    %v147 = vperm.slane %v38, 5
    %v148 = vperm.slane %v38, 7
    %v157 = vperm.slane %v141, 1
    %v158 = vperm.slane %v142, 1
    %v159 = vperm.slane %v143, 1
    %v160 = vperm.slane %v144, 1
    %v161 = vperm.slane %v145, 1
    %v162 = vperm.slane %v146, 1
    %v163 = vperm.slane %v147, 1
    %v164 = vperm.slane %v148, 1
    %v165 = vmul.f32 %v127, %v157
    %v166 = vmul.f32 %v127, %v158
    %v167 = vmul.f32 %v127, %v159
    %v168 = vmul.f32 %v127, %v160
    %v169 = vmul.f32 %v127, %v161
    %v170 = vmul.f32 %v127, %v162
    %v171 = vmul.f32 %v127, %v163
    %v172 = vmul.f32 %v127, %v164
    %v173 = vmul.f32 %v131, %v157
    %v174 = vmul.f32 %v131, %v158
    %v175 = vmul.f32 %v131, %v159
    %v176 = vmul.f32 %v131, %v160
    %v177 = vmul.f32 %v131, %v161
    %v178 = vmul.f32 %v131, %v162
    %v179 = vmul.f32 %v131, %v163
    %v180 = vmul.f32 %v131, %v164
    %v181 = vmul.f32 %v135, %v157
    %v182 = vmul.f32 %v135, %v158
    %v183 = vmul.f32 %v135, %v159
    %v184 = vmul.f32 %v135, %v160
    %v185 = vmul.f32 %v135, %v161
    %v186 = vmul.f32 %v135, %v162
    %v187 = vmul.f32 %v135, %v163
    %v188 = vmul.f32 %v135, %v164
    %v189 = vmul.f32 %v139, %v157
    %v190 = vmul.f32 %v139, %v158
    %v191 = vmul.f32 %v139, %v159
    %v192 = vmul.f32 %v139, %v160
    %v193 = vmul.f32 %v139, %v161
    %v194 = vmul.f32 %v139, %v162
    %v195 = vmul.f32 %v139, %v163
    %v196 = vmul.f32 %v139, %v164
    %v197 = vadd.f32 %v93, %v165
    %v198 = vadd.f32 %v94, %v166
    %v199 = vadd.f32 %v95, %v167
    %v200 = vadd.f32 %v96, %v168
    %v201 = vadd.f32 %v97, %v169
    %v202 = vadd.f32 %v98, %v170
    %v203 = vadd.f32 %v99, %v171
    %v204 = vadd.f32 %v100, %v172
    %v205 = vadd.f32 %v101, %v173
    %v206 = vadd.f32 %v102, %v174
    %v207 = vadd.f32 %v103, %v175
    %v208 = vadd.f32 %v104, %v176
    %v209 = vadd.f32 %v105, %v177
    %v210 = vadd.f32 %v106, %v178
    %v211 = vadd.f32 %v107, %v179
    %v212 = vadd.f32 %v108, %v180
    %v213 = vadd.f32 %v109, %v181
    %v214 = vadd.f32 %v110, %v182
    %v215 = vadd.f32 %v111, %v183
    %v216 = vadd.f32 %v112, %v184
    %v217 = vadd.f32 %v113, %v185
    %v218 = vadd.f32 %v114, %v186
    %v219 = vadd.f32 %v115, %v187
    %v220 = vadd.f32 %v116, %v188
    %v221 = vadd.f32 %v117, %v189
    %v222 = vadd.f32 %v118, %v190
    %v223 = vadd.f32 %v119, %v191
    %v224 = vadd.f32 %v120, %v192
    %v225 = vadd.f32 %v121, %v193
    %v226 = vadd.f32 %v122, %v194
    %v227 = vadd.f32 %v123, %v195
    %v228 = vadd.f32 %v124, %v196
    %230 = vset.pattern.permute.xlu0 0
    %231 = vperm.xlu0 %230, %v43
    %v232 = vpop.permute.xlu0 %231
    %235 = vset.pattern.permute.xlu0 0
    %236 = vperm.xlu0 %235, %v44
    %v237 = vpop.permute.xlu0 %236
    %240 = vset.pattern.permute.xlu0 0
    %241 = vperm.xlu0 %240, %v45
    %v242 = vpop.permute.xlu0 %241
    %245 = vset.pattern.permute.xlu0 0
    %246 = vperm.xlu0 %245, %v46
    %v247 = vpop.permute.xlu0 %246
    %v249 = vadd.f32 %v197, %v232
    %v250 = vadd.f32 %v198, %v232
    %v251 = vadd.f32 %v199, %v232
    %v252 = vadd.f32 %v200, %v232
    %v253 = vadd.f32 %v201, %v232
    %v254 = vadd.f32 %v202, %v232
    %v255 = vadd.f32 %v203, %v232
    %v256 = vadd.f32 %v204, %v232
    %v257 = vadd.f32 %v205, %v237
    %v258 = vadd.f32 %v206, %v237
    %v259 = vadd.f32 %v207, %v237
    %v260 = vadd.f32 %v208, %v237
    %v261 = vadd.f32 %v209, %v237
    %v262 = vadd.f32 %v210, %v237
    %v263 = vadd.f32 %v211, %v237
    %v264 = vadd.f32 %v212, %v237
    %v265 = vadd.f32 %v213, %v242
    %v266 = vadd.f32 %v214, %v242
    %v267 = vadd.f32 %v215, %v242
    %v268 = vadd.f32 %v216, %v242
    %v269 = vadd.f32 %v217, %v242
    %v270 = vadd.f32 %v218, %v242
    %v271 = vadd.f32 %v219, %v242
    %v272 = vadd.f32 %v220, %v242
    %v273 = vadd.f32 %v221, %v247
    %v274 = vadd.f32 %v222, %v247
    %v275 = vadd.f32 %v223, %v247
    %v276 = vadd.f32 %v224, %v247
    %v277 = vadd.f32 %v225, %v247
    %v278 = vadd.f32 %v226, %v247
    %v279 = vadd.f32 %v227, %v247
    %v280 = vadd.f32 %v228, %v247
    %v281 = vmax.f32 %v249, 0.0
    %v282 = vmax.f32 %v250, 0.0
    %v283 = vmax.f32 %v251, 0.0
    %v284 = vmax.f32 %v252, 0.0
    %v285 = vmax.f32 %v253, 0.0
    %v286 = vmax.f32 %v254, 0.0
    %v287 = vmax.f32 %v255, 0.0
    %v288 = vmax.f32 %v256, 0.0
    %v289 = vmax.f32 %v257, 0.0
    %v290 = vmax.f32 %v258, 0.0
    %v291 = vmax.f32 %v259, 0.0
    %v292 = vmax.f32 %v260, 0.0
    %v293 = vmax.f32 %v261, 0.0
    %v294 = vmax.f32 %v262, 0.0
    %v295 = vmax.f32 %v263, 0.0
    %v296 = vmax.f32 %v264, 0.0
    %v297 = vmax.f32 %v265, 0.0
    %v298 = vmax.f32 %v266, 0.0
    %v299 = vmax.f32 %v267, 0.0
    %v300 = vmax.f32 %v268, 0.0
    %v301 = vmax.f32 %v269, 0.0
    %v302 = vmax.f32 %v270, 0.0
    %v303 = vmax.f32 %v271, 0.0
    %v304 = vmax.f32 %v272, 0.0
    %v305 = vmax.f32 %v273, 0.0
    %v306 = vmax.f32 %v274, 0.0
    %v307 = vmax.f32 %v275, 0.0
    %v308 = vmax.f32 %v276, 0.0
    %v309 = vmax.f32 %v277, 0.0
    %v310 = vmax.f32 %v278, 0.0
    %v311 = vmax.f32 %v279, 0.0
    %v312 = vmax.f32 %v280, 0.0
    %v313 = vld [vmem:[%s4] sm:$0xff]
    %v314 = vld [vmem:[%s4 + $0x8] sm:$0xff]
    %v315 = vld [vmem:[%s4 + $0x10] sm:$0xff]
    %v316 = vld [vmem:[%s4 + $0x18] sm:$0xff]
    %v317 = vld [vmem:[%s5] sm:$0xff]
    %v318 = vld [vmem:[%s5 + $0x8] sm:$0xff]
    %v319 = vld [vmem:[%s5 + $0x10] sm:$0xff]
    %v320 = vld [vmem:[%s5 + $0x18] sm:$0xff]
    %322 = vset.pattern.permute.xlu0 0
    %323 = vperm.xlu0 %322, %v317
    %v324 = vpop.permute.xlu0 %323
    %327 = vset.pattern.permute.xlu0 0
    %328 = vperm.xlu0 %327, %v318
    %v329 = vpop.permute.xlu0 %328
    %332 = vset.pattern.permute.xlu0 0
    %333 = vperm.xlu0 %332, %v319
    %v334 = vpop.permute.xlu0 %333
    %337 = vset.pattern.permute.xlu0 0
    %338 = vperm.xlu0 %337, %v320
    %v339 = vpop.permute.xlu0 %338
    %vm341 = vcmask 261120
    %v343 = vsel %vm341, %v313, 0
    %v346 = vsel %vm341, %v314, 0
    %v349 = vsel %vm341, %v315, 0
    %v352 = vsel %vm341, %v316, 0
    %354 = vmatpush.msra.mxu0 0.0
    %355 = vmatpush.msra.mxu0 0.0
    %356 = vmatpush.msra.mxu0 0.0
    %357 = vmatpush.msra.mxu0 0.0
    %358 = vmatpush.msra.mxu0 0.0
    %359 = vmatpush.msra.mxu0 0.0
    %360 = vmatpush.msra.mxu0 0.0
    %361 = vmatpush.msra.mxu0 0.0
    %362 = vmatpush.msra.mxu0 0.0
    %363 = vmatpush.msra.mxu0 0.0
    %364 = vmatpush.msra.mxu0 0.0
    %365 = vmatpush.msra.mxu0 0.0
    %366 = vmatpush.msra.mxu0 %v305
    %367 = vmatpush.msra.mxu0 %v297
    %368 = vmatpush.msra.mxu0 %v289
    %369 = vmatpush.msra.mxu0 %v281
    %370 = vmatmul.f32.gmra.mxu0 %v343
    %v371 = vpop.f32.mrf.mxu0
    %v372 = vadd.f32 %v324, %v371
    %373 = vmatmul.f32.gmra.mxu0 %v346
    %v374 = vpop.f32.mrf.mxu0
    %v375 = vadd.f32 %v329, %v374
    %376 = vmatmul.f32.gmra.mxu0 %v349
    %v377 = vpop.f32.mrf.mxu0
    %v378 = vadd.f32 %v334, %v377
    %379 = vmatmul.f32.gmra.mxu0 %v352
    %v380 = vpop.f32.mrf.mxu0
    %v381 = vadd.f32 %v339, %v380
    %382 = vdwg.mxu0
    %383 = vmatpush.msra.mxu0 0.0
    %384 = vmatpush.msra.mxu0 0.0
    %385 = vmatpush.msra.mxu0 0.0
    %386 = vmatpush.msra.mxu0 0.0
    %387 = vmatpush.msra.mxu0 0.0
    %388 = vmatpush.msra.mxu0 0.0
    %389 = vmatpush.msra.mxu0 0.0
    %390 = vmatpush.msra.mxu0 0.0
    %391 = vmatpush.msra.mxu0 0.0
    %392 = vmatpush.msra.mxu0 0.0
    %393 = vmatpush.msra.mxu0 0.0
    %394 = vmatpush.msra.mxu0 0.0
    %395 = vmatpush.msra.mxu0 %v306
    %396 = vmatpush.msra.mxu0 %v298
    %397 = vmatpush.msra.mxu0 %v290
    %398 = vmatpush.msra.mxu0 %v282
    %399 = vmatmul.f32.gmra.mxu0 %v343
    %v400 = vpop.f32.mrf.mxu0
    %v401 = vadd.f32 %v324, %v400
    %402 = vmatmul.f32.gmra.mxu0 %v346
    %v403 = vpop.f32.mrf.mxu0
    %v404 = vadd.f32 %v329, %v403
    %405 = vmatmul.f32.gmra.mxu0 %v349
    %v406 = vpop.f32.mrf.mxu0
    %v407 = vadd.f32 %v334, %v406
    %408 = vmatmul.f32.gmra.mxu0 %v352
    %v409 = vpop.f32.mrf.mxu0
    %v410 = vadd.f32 %v339, %v409
    %411 = vdwg.mxu0
    %412 = vmatpush.msra.mxu0 0.0
    %413 = vmatpush.msra.mxu0 0.0
    %414 = vmatpush.msra.mxu0 0.0
    %415 = vmatpush.msra.mxu0 0.0
    %416 = vmatpush.msra.mxu0 0.0
    %417 = vmatpush.msra.mxu0 0.0
    %418 = vmatpush.msra.mxu0 0.0
    %419 = vmatpush.msra.mxu0 0.0
    %420 = vmatpush.msra.mxu0 0.0
    %421 = vmatpush.msra.mxu0 0.0
    %422 = vmatpush.msra.mxu0 0.0
    %423 = vmatpush.msra.mxu0 0.0
    %424 = vmatpush.msra.mxu0 %v307
    %425 = vmatpush.msra.mxu0 %v299
    %426 = vmatpush.msra.mxu0 %v291
    %427 = vmatpush.msra.mxu0 %v283
    %428 = vmatmul.f32.gmra.mxu0 %v343
    %v429 = vpop.f32.mrf.mxu0
    %v430 = vadd.f32 %v324, %v429
    %431 = vmatmul.f32.gmra.mxu0 %v346
    %v432 = vpop.f32.mrf.mxu0
    %v433 = vadd.f32 %v329, %v432
    %434 = vmatmul.f32.gmra.mxu0 %v349
    %v435 = vpop.f32.mrf.mxu0
    %v436 = vadd.f32 %v334, %v435
    %437 = vmatmul.f32.gmra.mxu0 %v352
    %v438 = vpop.f32.mrf.mxu0
    %v439 = vadd.f32 %v339, %v438
    %440 = vdwg.mxu0
    %441 = vmatpush.msra.mxu0 0.0
    %442 = vmatpush.msra.mxu0 0.0
    %443 = vmatpush.msra.mxu0 0.0
    %444 = vmatpush.msra.mxu0 0.0
    %445 = vmatpush.msra.mxu0 0.0
    %446 = vmatpush.msra.mxu0 0.0
    %447 = vmatpush.msra.mxu0 0.0
    %448 = vmatpush.msra.mxu0 0.0
    %449 = vmatpush.msra.mxu0 0.0
    %450 = vmatpush.msra.mxu0 0.0
    %451 = vmatpush.msra.mxu0 0.0
    %452 = vmatpush.msra.mxu0 0.0
    %453 = vmatpush.msra.mxu0 %v308
    %454 = vmatpush.msra.mxu0 %v300
    %455 = vmatpush.msra.mxu0 %v292
    %456 = vmatpush.msra.mxu0 %v284
    %457 = vmatmul.f32.gmra.mxu0 %v343
    %v458 = vpop.f32.mrf.mxu0
    %v459 = vadd.f32 %v324, %v458
    %460 = vmatmul.f32.gmra.mxu0 %v346
    %v461 = vpop.f32.mrf.mxu0
    %v462 = vadd.f32 %v329, %v461
    %463 = vmatmul.f32.gmra.mxu0 %v349
    %v464 = vpop.f32.mrf.mxu0
    %v465 = vadd.f32 %v334, %v464
    %466 = vmatmul.f32.gmra.mxu0 %v352
    %v467 = vpop.f32.mrf.mxu0
    %v468 = vadd.f32 %v339, %v467
    %469 = vdwg.mxu0
    %470 = vmatpush.msra.mxu0 0.0
    %471 = vmatpush.msra.mxu0 0.0
    %472 = vmatpush.msra.mxu0 0.0
    %473 = vmatpush.msra.mxu0 0.0
    %474 = vmatpush.msra.mxu0 0.0
    %475 = vmatpush.msra.mxu0 0.0
    %476 = vmatpush.msra.mxu0 0.0
    %477 = vmatpush.msra.mxu0 0.0
    %478 = vmatpush.msra.mxu0 0.0
    %479 = vmatpush.msra.mxu0 0.0
    %480 = vmatpush.msra.mxu0 0.0
    %481 = vmatpush.msra.mxu0 0.0
    %482 = vmatpush.msra.mxu0 %v309
    %483 = vmatpush.msra.mxu0 %v301
    %484 = vmatpush.msra.mxu0 %v293
    %485 = vmatpush.msra.mxu0 %v285
    %486 = vmatmul.f32.gmra.mxu0 %v343
    %v487 = vpop.f32.mrf.mxu0
    %v488 = vadd.f32 %v324, %v487
    %489 = vmatmul.f32.gmra.mxu0 %v346
    %v490 = vpop.f32.mrf.mxu0
    %v491 = vadd.f32 %v329, %v490
    %492 = vmatmul.f32.gmra.mxu0 %v349
    %v493 = vpop.f32.mrf.mxu0
    %v494 = vadd.f32 %v334, %v493
    %495 = vmatmul.f32.gmra.mxu0 %v352
    %v496 = vpop.f32.mrf.mxu0
    %v497 = vadd.f32 %v339, %v496
    %498 = vdwg.mxu0
    %499 = vmatpush.msra.mxu0 0.0
    %500 = vmatpush.msra.mxu0 0.0
    %501 = vmatpush.msra.mxu0 0.0
    %502 = vmatpush.msra.mxu0 0.0
    %503 = vmatpush.msra.mxu0 0.0
    %504 = vmatpush.msra.mxu0 0.0
    %505 = vmatpush.msra.mxu0 0.0
    %506 = vmatpush.msra.mxu0 0.0
    %507 = vmatpush.msra.mxu0 0.0
    %508 = vmatpush.msra.mxu0 0.0
    %509 = vmatpush.msra.mxu0 0.0
    %510 = vmatpush.msra.mxu0 0.0
    %511 = vmatpush.msra.mxu0 %v310
    %512 = vmatpush.msra.mxu0 %v302
    %513 = vmatpush.msra.mxu0 %v294
    %514 = vmatpush.msra.mxu0 %v286
    %515 = vmatmul.f32.gmra.mxu0 %v343
    %v516 = vpop.f32.mrf.mxu0
    %v517 = vadd.f32 %v324, %v516
    %518 = vmatmul.f32.gmra.mxu0 %v346
    %v519 = vpop.f32.mrf.mxu0
    %v520 = vadd.f32 %v329, %v519
    %521 = vmatmul.f32.gmra.mxu0 %v349
    %v522 = vpop.f32.mrf.mxu0
    %v523 = vadd.f32 %v334, %v522
    %524 = vmatmul.f32.gmra.mxu0 %v352
    %v525 = vpop.f32.mrf.mxu0
    %v526 = vadd.f32 %v339, %v525
    %527 = vdwg.mxu0
    %528 = vmatpush.msra.mxu0 0.0
    %529 = vmatpush.msra.mxu0 0.0
    %530 = vmatpush.msra.mxu0 0.0
    %531 = vmatpush.msra.mxu0 0.0
    %532 = vmatpush.msra.mxu0 0.0
    %533 = vmatpush.msra.mxu0 0.0
    %534 = vmatpush.msra.mxu0 0.0
    %535 = vmatpush.msra.mxu0 0.0
    %536 = vmatpush.msra.mxu0 0.0
    %537 = vmatpush.msra.mxu0 0.0
    %538 = vmatpush.msra.mxu0 0.0
    %539 = vmatpush.msra.mxu0 0.0
    %540 = vmatpush.msra.mxu0 %v311
    %541 = vmatpush.msra.mxu0 %v303
    %542 = vmatpush.msra.mxu0 %v295
    %543 = vmatpush.msra.mxu0 %v287
    %544 = vmatmul.f32.gmra.mxu0 %v343
    %v545 = vpop.f32.mrf.mxu0
    %v546 = vadd.f32 %v324, %v545
    %547 = vmatmul.f32.gmra.mxu0 %v346
    %v548 = vpop.f32.mrf.mxu0
    %v549 = vadd.f32 %v329, %v548
    %550 = vmatmul.f32.gmra.mxu0 %v349
    %v551 = vpop.f32.mrf.mxu0
    %v552 = vadd.f32 %v334, %v551
    %553 = vmatmul.f32.gmra.mxu0 %v352
    %v554 = vpop.f32.mrf.mxu0
    %v555 = vadd.f32 %v339, %v554
    %556 = vdwg.mxu0
    %557 = vmatpush.msra.mxu0 0.0
    %558 = vmatpush.msra.mxu0 0.0
    %559 = vmatpush.msra.mxu0 0.0
    %560 = vmatpush.msra.mxu0 0.0
    %561 = vmatpush.msra.mxu0 0.0
    %562 = vmatpush.msra.mxu0 0.0
    %563 = vmatpush.msra.mxu0 0.0
    %564 = vmatpush.msra.mxu0 0.0
    %565 = vmatpush.msra.mxu0 0.0
    %566 = vmatpush.msra.mxu0 0.0
    %567 = vmatpush.msra.mxu0 0.0
    %568 = vmatpush.msra.mxu0 0.0
    %569 = vmatpush.msra.mxu0 %v312
    %570 = vmatpush.msra.mxu0 %v304
    %571 = vmatpush.msra.mxu0 %v296
    %572 = vmatpush.msra.mxu0 %v288
    %573 = vmatmul.f32.gmra.mxu0 %v343
    %v574 = vpop.f32.mrf.mxu0
    %v575 = vadd.f32 %v324, %v574
    %576 = vmatmul.f32.gmra.mxu0 %v346
    %v577 = vpop.f32.mrf.mxu0
    %v578 = vadd.f32 %v329, %v577
    %579 = vmatmul.f32.gmra.mxu0 %v349
    %v580 = vpop.f32.mrf.mxu0
    %v581 = vadd.f32 %v334, %v580
    %582 = vmatmul.f32.gmra.mxu0 %v352
    %v583 = vpop.f32.mrf.mxu0
    %v584 = vadd.f32 %v339, %v583
    %585 = vdwg.mxu0
    %v586 = vmax.f32 %v372, 0.0
    %v587 = vmax.f32 %v401, 0.0
    %v588 = vmax.f32 %v430, 0.0
    %v589 = vmax.f32 %v459, 0.0
    %v590 = vmax.f32 %v488, 0.0
    %v591 = vmax.f32 %v517, 0.0
    %v592 = vmax.f32 %v546, 0.0
    %v593 = vmax.f32 %v575, 0.0
    %v594 = vmax.f32 %v375, 0.0
    %v595 = vmax.f32 %v404, 0.0
    %v596 = vmax.f32 %v433, 0.0
    %v597 = vmax.f32 %v462, 0.0
    %v598 = vmax.f32 %v491, 0.0
    %v599 = vmax.f32 %v520, 0.0
    %v600 = vmax.f32 %v549, 0.0
    %v601 = vmax.f32 %v578, 0.0
    %v602 = vmax.f32 %v378, 0.0
    %v603 = vmax.f32 %v407, 0.0
    %v604 = vmax.f32 %v436, 0.0
    %v605 = vmax.f32 %v465, 0.0
    %v606 = vmax.f32 %v494, 0.0
    %v607 = vmax.f32 %v523, 0.0
    %v608 = vmax.f32 %v552, 0.0
    %v609 = vmax.f32 %v581, 0.0
    %v610 = vmax.f32 %v381, 0.0
    %v611 = vmax.f32 %v410, 0.0
    %v612 = vmax.f32 %v439, 0.0
    %v613 = vmax.f32 %v468, 0.0
    %v614 = vmax.f32 %v497, 0.0
    %v615 = vmax.f32 %v526, 0.0
    %v616 = vmax.f32 %v555, 0.0
    %v617 = vmax.f32 %v584, 0.0
    %v618 = vld [vmem:[%s6] sm:$0xff]
    %v619 = vld [vmem:[%s6 + $0x8] sm:$0xff]
    %v620 = vld [vmem:[%s6 + $0x10] sm:$0xff]
    %v621 = vld [vmem:[%s6 + $0x18] sm:$0xff]
    %v622 = vld [vmem:[%s7] sm:$0xff]
    %v623 = vld [vmem:[%s7 + $0x8] sm:$0xff]
    %v624 = vld [vmem:[%s7 + $0x10] sm:$0xff]
    %v625 = vld [vmem:[%s7 + $0x18] sm:$0xff]
    %627 = vset.pattern.permute.xlu0 0
    %628 = vperm.xlu0 %627, %v622
    %v629 = vpop.permute.xlu0 %628
    %632 = vset.pattern.permute.xlu0 0
    %633 = vperm.xlu0 %632, %v623
    %v634 = vpop.permute.xlu0 %633
    %637 = vset.pattern.permute.xlu0 0
    %638 = vperm.xlu0 %637, %v624
    %v639 = vpop.permute.xlu0 %638
    %642 = vset.pattern.permute.xlu0 0
    %643 = vperm.xlu0 %642, %v625
    %v644 = vpop.permute.xlu0 %643
    %v647 = vsel %vm341, %v618, 0
    %v650 = vsel %vm341, %v619, 0
    %v653 = vsel %vm341, %v620, 0
    %v656 = vsel %vm341, %v621, 0
    %658 = vmatpush.msra.mxu0 0.0
    %659 = vmatpush.msra.mxu0 0.0
    %660 = vmatpush.msra.mxu0 0.0
    %661 = vmatpush.msra.mxu0 0.0
    %662 = vmatpush.msra.mxu0 0.0
    %663 = vmatpush.msra.mxu0 0.0
    %664 = vmatpush.msra.mxu0 0.0
    %665 = vmatpush.msra.mxu0 0.0
    %666 = vmatpush.msra.mxu0 0.0
    %667 = vmatpush.msra.mxu0 0.0
    %668 = vmatpush.msra.mxu0 0.0
    %669 = vmatpush.msra.mxu0 0.0
    %670 = vmatpush.msra.mxu0 %v610
    %671 = vmatpush.msra.mxu0 %v602
    %672 = vmatpush.msra.mxu0 %v594
    %673 = vmatpush.msra.mxu0 %v586
    %674 = vmatmul.f32.gmra.mxu0 %v647
    %v675 = vpop.f32.mrf.mxu0
    %v676 = vadd.f32 %v629, %v675
    %677 = vmatmul.f32.gmra.mxu0 %v650
    %v678 = vpop.f32.mrf.mxu0
    %v679 = vadd.f32 %v634, %v678
    %680 = vmatmul.f32.gmra.mxu0 %v653
    %v681 = vpop.f32.mrf.mxu0
    %v682 = vadd.f32 %v639, %v681
    %683 = vmatmul.f32.gmra.mxu0 %v656
    %v684 = vpop.f32.mrf.mxu0
    %v685 = vadd.f32 %v644, %v684
    %686 = vdwg.mxu0
    %687 = vmatpush.msra.mxu0 0.0
    %688 = vmatpush.msra.mxu0 0.0
    %689 = vmatpush.msra.mxu0 0.0
    %690 = vmatpush.msra.mxu0 0.0
    %691 = vmatpush.msra.mxu0 0.0
    %692 = vmatpush.msra.mxu0 0.0
    %693 = vmatpush.msra.mxu0 0.0
    %694 = vmatpush.msra.mxu0 0.0
    %695 = vmatpush.msra.mxu0 0.0
    %696 = vmatpush.msra.mxu0 0.0
    %697 = vmatpush.msra.mxu0 0.0
    %698 = vmatpush.msra.mxu0 0.0
    %699 = vmatpush.msra.mxu0 %v611
    %700 = vmatpush.msra.mxu0 %v603
    %701 = vmatpush.msra.mxu0 %v595
    %702 = vmatpush.msra.mxu0 %v587
    %703 = vmatmul.f32.gmra.mxu0 %v647
    %v704 = vpop.f32.mrf.mxu0
    %v705 = vadd.f32 %v629, %v704
    %706 = vmatmul.f32.gmra.mxu0 %v650
    %v707 = vpop.f32.mrf.mxu0
    %v708 = vadd.f32 %v634, %v707
    %709 = vmatmul.f32.gmra.mxu0 %v653
    %v710 = vpop.f32.mrf.mxu0
    %v711 = vadd.f32 %v639, %v710
    %712 = vmatmul.f32.gmra.mxu0 %v656
    %v713 = vpop.f32.mrf.mxu0
    %v714 = vadd.f32 %v644, %v713
    %715 = vdwg.mxu0
    %716 = vmatpush.msra.mxu0 0.0
    %717 = vmatpush.msra.mxu0 0.0
    %718 = vmatpush.msra.mxu0 0.0
    %719 = vmatpush.msra.mxu0 0.0
    %720 = vmatpush.msra.mxu0 0.0
    %721 = vmatpush.msra.mxu0 0.0
    %722 = vmatpush.msra.mxu0 0.0
    %723 = vmatpush.msra.mxu0 0.0
    %724 = vmatpush.msra.mxu0 0.0
    %725 = vmatpush.msra.mxu0 0.0
    %726 = vmatpush.msra.mxu0 0.0
    %727 = vmatpush.msra.mxu0 0.0
    %728 = vmatpush.msra.mxu0 %v612
    %729 = vmatpush.msra.mxu0 %v604
    %730 = vmatpush.msra.mxu0 %v596
    %731 = vmatpush.msra.mxu0 %v588
    %732 = vmatmul.f32.gmra.mxu0 %v647
    %v733 = vpop.f32.mrf.mxu0
    %v734 = vadd.f32 %v629, %v733
    %735 = vmatmul.f32.gmra.mxu0 %v650
    %v736 = vpop.f32.mrf.mxu0
    %v737 = vadd.f32 %v634, %v736
    %738 = vmatmul.f32.gmra.mxu0 %v653
    %v739 = vpop.f32.mrf.mxu0
    %v740 = vadd.f32 %v639, %v739
    %741 = vmatmul.f32.gmra.mxu0 %v656
    %v742 = vpop.f32.mrf.mxu0
    %v743 = vadd.f32 %v644, %v742
    %744 = vdwg.mxu0
    %745 = vmatpush.msra.mxu0 0.0
    %746 = vmatpush.msra.mxu0 0.0
    %747 = vmatpush.msra.mxu0 0.0
    %748 = vmatpush.msra.mxu0 0.0
    %749 = vmatpush.msra.mxu0 0.0
    %750 = vmatpush.msra.mxu0 0.0
    %751 = vmatpush.msra.mxu0 0.0
    %752 = vmatpush.msra.mxu0 0.0
    %753 = vmatpush.msra.mxu0 0.0
    %754 = vmatpush.msra.mxu0 0.0
    %755 = vmatpush.msra.mxu0 0.0
    %756 = vmatpush.msra.mxu0 0.0
    %757 = vmatpush.msra.mxu0 %v613
    %758 = vmatpush.msra.mxu0 %v605
    %759 = vmatpush.msra.mxu0 %v597
    %760 = vmatpush.msra.mxu0 %v589
    %761 = vmatmul.f32.gmra.mxu0 %v647
    %v762 = vpop.f32.mrf.mxu0
    %v763 = vadd.f32 %v629, %v762
    %764 = vmatmul.f32.gmra.mxu0 %v650
    %v765 = vpop.f32.mrf.mxu0
    %v766 = vadd.f32 %v634, %v765
    %767 = vmatmul.f32.gmra.mxu0 %v653
    %v768 = vpop.f32.mrf.mxu0
    %v769 = vadd.f32 %v639, %v768
    %770 = vmatmul.f32.gmra.mxu0 %v656
    %v771 = vpop.f32.mrf.mxu0
    %v772 = vadd.f32 %v644, %v771
    %773 = vdwg.mxu0
    %774 = vmatpush.msra.mxu0 0.0
    %775 = vmatpush.msra.mxu0 0.0
    %776 = vmatpush.msra.mxu0 0.0
    %777 = vmatpush.msra.mxu0 0.0
    %778 = vmatpush.msra.mxu0 0.0
    %779 = vmatpush.msra.mxu0 0.0
    %780 = vmatpush.msra.mxu0 0.0
    %781 = vmatpush.msra.mxu0 0.0
    %782 = vmatpush.msra.mxu0 0.0
    %783 = vmatpush.msra.mxu0 0.0
    %784 = vmatpush.msra.mxu0 0.0
    %785 = vmatpush.msra.mxu0 0.0
    %786 = vmatpush.msra.mxu0 %v614
    %787 = vmatpush.msra.mxu0 %v606
    %788 = vmatpush.msra.mxu0 %v598
    %789 = vmatpush.msra.mxu0 %v590
    %790 = vmatmul.f32.gmra.mxu0 %v647
    %v791 = vpop.f32.mrf.mxu0
    %v792 = vadd.f32 %v629, %v791
    %793 = vmatmul.f32.gmra.mxu0 %v650
    %v794 = vpop.f32.mrf.mxu0
    %v795 = vadd.f32 %v634, %v794
    %796 = vmatmul.f32.gmra.mxu0 %v653
    %v797 = vpop.f32.mrf.mxu0
    %v798 = vadd.f32 %v639, %v797
    %799 = vmatmul.f32.gmra.mxu0 %v656
    %v800 = vpop.f32.mrf.mxu0
    %v801 = vadd.f32 %v644, %v800
    %802 = vdwg.mxu0
    %803 = vmatpush.msra.mxu0 0.0
    %804 = vmatpush.msra.mxu0 0.0
    %805 = vmatpush.msra.mxu0 0.0
    %806 = vmatpush.msra.mxu0 0.0
    %807 = vmatpush.msra.mxu0 0.0
    %808 = vmatpush.msra.mxu0 0.0
    %809 = vmatpush.msra.mxu0 0.0
    %810 = vmatpush.msra.mxu0 0.0
    %811 = vmatpush.msra.mxu0 0.0
    %812 = vmatpush.msra.mxu0 0.0
    %813 = vmatpush.msra.mxu0 0.0
    %814 = vmatpush.msra.mxu0 0.0
    %815 = vmatpush.msra.mxu0 %v615
    %816 = vmatpush.msra.mxu0 %v607
    %817 = vmatpush.msra.mxu0 %v599
    %818 = vmatpush.msra.mxu0 %v591
    %819 = vmatmul.f32.gmra.mxu0 %v647
    %v820 = vpop.f32.mrf.mxu0
    %v821 = vadd.f32 %v629, %v820
    %822 = vmatmul.f32.gmra.mxu0 %v650
    %v823 = vpop.f32.mrf.mxu0
    %v824 = vadd.f32 %v634, %v823
    %825 = vmatmul.f32.gmra.mxu0 %v653
    %v826 = vpop.f32.mrf.mxu0
    %v827 = vadd.f32 %v639, %v826
    %828 = vmatmul.f32.gmra.mxu0 %v656
    %v829 = vpop.f32.mrf.mxu0
    %v830 = vadd.f32 %v644, %v829
    %831 = vdwg.mxu0
    %832 = vmatpush.msra.mxu0 0.0
    %833 = vmatpush.msra.mxu0 0.0
    %834 = vmatpush.msra.mxu0 0.0
    %835 = vmatpush.msra.mxu0 0.0
    %836 = vmatpush.msra.mxu0 0.0
    %837 = vmatpush.msra.mxu0 0.0
    %838 = vmatpush.msra.mxu0 0.0
    %839 = vmatpush.msra.mxu0 0.0
    %840 = vmatpush.msra.mxu0 0.0
    %841 = vmatpush.msra.mxu0 0.0
    %842 = vmatpush.msra.mxu0 0.0
    %843 = vmatpush.msra.mxu0 0.0
    %844 = vmatpush.msra.mxu0 %v616
    %845 = vmatpush.msra.mxu0 %v608
    %846 = vmatpush.msra.mxu0 %v600
    %847 = vmatpush.msra.mxu0 %v592
    %848 = vmatmul.f32.gmra.mxu0 %v647
    %v849 = vpop.f32.mrf.mxu0
    %v850 = vadd.f32 %v629, %v849
    %851 = vmatmul.f32.gmra.mxu0 %v650
    %v852 = vpop.f32.mrf.mxu0
    %v853 = vadd.f32 %v634, %v852
    %854 = vmatmul.f32.gmra.mxu0 %v653
    %v855 = vpop.f32.mrf.mxu0
    %v856 = vadd.f32 %v639, %v855
    %857 = vmatmul.f32.gmra.mxu0 %v656
    %v858 = vpop.f32.mrf.mxu0
    %v859 = vadd.f32 %v644, %v858
    %860 = vdwg.mxu0
    %861 = vmatpush.msra.mxu0 0.0
    %862 = vmatpush.msra.mxu0 0.0
    %863 = vmatpush.msra.mxu0 0.0
    %864 = vmatpush.msra.mxu0 0.0
    %865 = vmatpush.msra.mxu0 0.0
    %866 = vmatpush.msra.mxu0 0.0
    %867 = vmatpush.msra.mxu0 0.0
    %868 = vmatpush.msra.mxu0 0.0
    %869 = vmatpush.msra.mxu0 0.0
    %870 = vmatpush.msra.mxu0 0.0
    %871 = vmatpush.msra.mxu0 0.0
    %872 = vmatpush.msra.mxu0 0.0
    %873 = vmatpush.msra.mxu0 %v617
    %874 = vmatpush.msra.mxu0 %v609
    %875 = vmatpush.msra.mxu0 %v601
    %876 = vmatpush.msra.mxu0 %v593
    %877 = vmatmul.f32.gmra.mxu0 %v647
    %v878 = vpop.f32.mrf.mxu0
    %v879 = vadd.f32 %v629, %v878
    %880 = vmatmul.f32.gmra.mxu0 %v650
    %v881 = vpop.f32.mrf.mxu0
    %v882 = vadd.f32 %v634, %v881
    %883 = vmatmul.f32.gmra.mxu0 %v653
    %v884 = vpop.f32.mrf.mxu0
    %v885 = vadd.f32 %v639, %v884
    %886 = vmatmul.f32.gmra.mxu0 %v656
    %v887 = vpop.f32.mrf.mxu0
    %v888 = vadd.f32 %v644, %v887
    %889 = vdwg.mxu0
    %v890 = vmax.f32 %v676, 0.0
    %v891 = vmax.f32 %v705, 0.0
    %v892 = vmax.f32 %v734, 0.0
    %v893 = vmax.f32 %v763, 0.0
    %v894 = vmax.f32 %v792, 0.0
    %v895 = vmax.f32 %v821, 0.0
    %v896 = vmax.f32 %v850, 0.0
    %v897 = vmax.f32 %v879, 0.0
    %v898 = vmax.f32 %v679, 0.0
    %v899 = vmax.f32 %v708, 0.0
    %v900 = vmax.f32 %v737, 0.0
    %v901 = vmax.f32 %v766, 0.0
    %v902 = vmax.f32 %v795, 0.0
    %v903 = vmax.f32 %v824, 0.0
    %v904 = vmax.f32 %v853, 0.0
    %v905 = vmax.f32 %v882, 0.0
    %v906 = vmax.f32 %v682, 0.0
    %v907 = vmax.f32 %v711, 0.0
    %v908 = vmax.f32 %v740, 0.0
    %v909 = vmax.f32 %v769, 0.0
    %v910 = vmax.f32 %v798, 0.0
    %v911 = vmax.f32 %v827, 0.0
    %v912 = vmax.f32 %v856, 0.0
    %v913 = vmax.f32 %v885, 0.0
    %v914 = vmax.f32 %v685, 0.0
    %v915 = vmax.f32 %v714, 0.0
    %v916 = vmax.f32 %v743, 0.0
    %v917 = vmax.f32 %v772, 0.0
    %v918 = vmax.f32 %v801, 0.0
    %v919 = vmax.f32 %v830, 0.0
    %v920 = vmax.f32 %v859, 0.0
    %v921 = vmax.f32 %v888, 0.0
    %v922 = vld [vmem:[%s8] sm:$0x3]
    %v923 = vld [vmem:[%s9] sm:$0x3]
    %925 = vset.pattern.permute.xlu0 0
    %926 = vperm.xlu0 %925, %v923
    %v927 = vpop.permute.xlu0 %926
    %v930 = vsel %vm341, %v922, 0
    %932 = vmatpush.msra.mxu0 0.0
    %933 = vmatpush.msra.mxu0 0.0
    %934 = vmatpush.msra.mxu0 0.0
    %935 = vmatpush.msra.mxu0 0.0
    %936 = vmatpush.msra.mxu0 0.0
    %937 = vmatpush.msra.mxu0 0.0
    %938 = vmatpush.msra.mxu0 0.0
    %939 = vmatpush.msra.mxu0 0.0
    %940 = vmatpush.msra.mxu0 0.0
    %941 = vmatpush.msra.mxu0 0.0
    %942 = vmatpush.msra.mxu0 0.0
    %943 = vmatpush.msra.mxu0 0.0
    %944 = vmatpush.msra.mxu0 %v914
    %945 = vmatpush.msra.mxu0 %v906
    %946 = vmatpush.msra.mxu0 %v898
    %947 = vmatpush.msra.mxu0 %v890
    %948 = vmatmul.f32.gmra.mxu0 %v930
    %v949 = vpop.f32.mrf.mxu0
    %v950 = vadd.f32 %v927, %v949
    %951 = vdwg.mxu0
    %952 = vmatpush.msra.mxu0 0.0
    %953 = vmatpush.msra.mxu0 0.0
    %954 = vmatpush.msra.mxu0 0.0
    %955 = vmatpush.msra.mxu0 0.0
    %956 = vmatpush.msra.mxu0 0.0
    %957 = vmatpush.msra.mxu0 0.0
    %958 = vmatpush.msra.mxu0 0.0
    %959 = vmatpush.msra.mxu0 0.0
    %960 = vmatpush.msra.mxu0 0.0
    %961 = vmatpush.msra.mxu0 0.0
    %962 = vmatpush.msra.mxu0 0.0
    %963 = vmatpush.msra.mxu0 0.0
    %964 = vmatpush.msra.mxu0 %v915
    %965 = vmatpush.msra.mxu0 %v907
    %966 = vmatpush.msra.mxu0 %v899
    %967 = vmatpush.msra.mxu0 %v891
    %968 = vmatmul.f32.gmra.mxu0 %v930
    %v969 = vpop.f32.mrf.mxu0
    %v970 = vadd.f32 %v927, %v969
    %971 = vdwg.mxu0
    %972 = vmatpush.msra.mxu0 0.0
    %973 = vmatpush.msra.mxu0 0.0
    %974 = vmatpush.msra.mxu0 0.0
    %975 = vmatpush.msra.mxu0 0.0
    %976 = vmatpush.msra.mxu0 0.0
    %977 = vmatpush.msra.mxu0 0.0
    %978 = vmatpush.msra.mxu0 0.0
    %979 = vmatpush.msra.mxu0 0.0
    %980 = vmatpush.msra.mxu0 0.0
    %981 = vmatpush.msra.mxu0 0.0
    %982 = vmatpush.msra.mxu0 0.0
    %983 = vmatpush.msra.mxu0 0.0
    %984 = vmatpush.msra.mxu0 %v916
    %985 = vmatpush.msra.mxu0 %v908
    %986 = vmatpush.msra.mxu0 %v900
    %987 = vmatpush.msra.mxu0 %v892
    %988 = vmatmul.f32.gmra.mxu0 %v930
    %v989 = vpop.f32.mrf.mxu0
    %v990 = vadd.f32 %v927, %v989
    %991 = vdwg.mxu0
    %992 = vmatpush.msra.mxu0 0.0
    %993 = vmatpush.msra.mxu0 0.0
    %994 = vmatpush.msra.mxu0 0.0
    %995 = vmatpush.msra.mxu0 0.0
    %996 = vmatpush.msra.mxu0 0.0
    %997 = vmatpush.msra.mxu0 0.0
    %998 = vmatpush.msra.mxu0 0.0
    %999 = vmatpush.msra.mxu0 0.0
    %1000 = vmatpush.msra.mxu0 0.0
    %1001 = vmatpush.msra.mxu0 0.0
    %1002 = vmatpush.msra.mxu0 0.0
    %1003 = vmatpush.msra.mxu0 0.0
    %1004 = vmatpush.msra.mxu0 %v917
    %1005 = vmatpush.msra.mxu0 %v909
    %1006 = vmatpush.msra.mxu0 %v901
    %1007 = vmatpush.msra.mxu0 %v893
    %1008 = vmatmul.f32.gmra.mxu0 %v930
    %v1009 = vpop.f32.mrf.mxu0
    %v1010 = vadd.f32 %v927, %v1009
    %1011 = vdwg.mxu0
    %1012 = vmatpush.msra.mxu0 0.0
    %1013 = vmatpush.msra.mxu0 0.0
    %1014 = vmatpush.msra.mxu0 0.0
    %1015 = vmatpush.msra.mxu0 0.0
    %1016 = vmatpush.msra.mxu0 0.0
    %1017 = vmatpush.msra.mxu0 0.0
    %1018 = vmatpush.msra.mxu0 0.0
    %1019 = vmatpush.msra.mxu0 0.0
    %1020 = vmatpush.msra.mxu0 0.0
    %1021 = vmatpush.msra.mxu0 0.0
    %1022 = vmatpush.msra.mxu0 0.0
    %1023 = vmatpush.msra.mxu0 0.0
    %1024 = vmatpush.msra.mxu0 %v918
    %1025 = vmatpush.msra.mxu0 %v910
    %1026 = vmatpush.msra.mxu0 %v902
    %1027 = vmatpush.msra.mxu0 %v894
    %1028 = vmatmul.f32.gmra.mxu0 %v930
    %v1029 = vpop.f32.mrf.mxu0
    %v1030 = vadd.f32 %v927, %v1029
    %1031 = vdwg.mxu0
    %1032 = vmatpush.msra.mxu0 0.0
    %1033 = vmatpush.msra.mxu0 0.0
    %1034 = vmatpush.msra.mxu0 0.0
    %1035 = vmatpush.msra.mxu0 0.0
    %1036 = vmatpush.msra.mxu0 0.0
    %1037 = vmatpush.msra.mxu0 0.0
    %1038 = vmatpush.msra.mxu0 0.0
    %1039 = vmatpush.msra.mxu0 0.0
    %1040 = vmatpush.msra.mxu0 0.0
    %1041 = vmatpush.msra.mxu0 0.0
    %1042 = vmatpush.msra.mxu0 0.0
    %1043 = vmatpush.msra.mxu0 0.0
    %1044 = vmatpush.msra.mxu0 %v919
    %1045 = vmatpush.msra.mxu0 %v911
    %1046 = vmatpush.msra.mxu0 %v903
    %1047 = vmatpush.msra.mxu0 %v895
    %1048 = vmatmul.f32.gmra.mxu0 %v930
    %v1049 = vpop.f32.mrf.mxu0
    %v1050 = vadd.f32 %v927, %v1049
    %1051 = vdwg.mxu0
    %1052 = vmatpush.msra.mxu0 0.0
    %1053 = vmatpush.msra.mxu0 0.0
    %1054 = vmatpush.msra.mxu0 0.0
    %1055 = vmatpush.msra.mxu0 0.0
    %1056 = vmatpush.msra.mxu0 0.0
    %1057 = vmatpush.msra.mxu0 0.0
    %1058 = vmatpush.msra.mxu0 0.0
    %1059 = vmatpush.msra.mxu0 0.0
    %1060 = vmatpush.msra.mxu0 0.0
    %1061 = vmatpush.msra.mxu0 0.0
    %1062 = vmatpush.msra.mxu0 0.0
    %1063 = vmatpush.msra.mxu0 0.0
    %1064 = vmatpush.msra.mxu0 %v920
    %1065 = vmatpush.msra.mxu0 %v912
    %1066 = vmatpush.msra.mxu0 %v904
    %1067 = vmatpush.msra.mxu0 %v896
    %1068 = vmatmul.f32.gmra.mxu0 %v930
    %v1069 = vpop.f32.mrf.mxu0
    %v1070 = vadd.f32 %v927, %v1069
    %1071 = vdwg.mxu0
    %1072 = vmatpush.msra.mxu0 0.0
    %1073 = vmatpush.msra.mxu0 0.0
    %1074 = vmatpush.msra.mxu0 0.0
    %1075 = vmatpush.msra.mxu0 0.0
    %1076 = vmatpush.msra.mxu0 0.0
    %1077 = vmatpush.msra.mxu0 0.0
    %1078 = vmatpush.msra.mxu0 0.0
    %1079 = vmatpush.msra.mxu0 0.0
    %1080 = vmatpush.msra.mxu0 0.0
    %1081 = vmatpush.msra.mxu0 0.0
    %1082 = vmatpush.msra.mxu0 0.0
    %1083 = vmatpush.msra.mxu0 0.0
    %1084 = vmatpush.msra.mxu0 %v921
    %1085 = vmatpush.msra.mxu0 %v913
    %1086 = vmatpush.msra.mxu0 %v905
    %1087 = vmatpush.msra.mxu0 %v897
    %1088 = vmatmul.f32.gmra.mxu0 %v930
    %v1089 = vpop.f32.mrf.mxu0
    %v1090 = vadd.f32 %v927, %v1089
    %1091 = vdwg.mxu0
    %s1092 = sld [smem:[#allocation2]]
    %v1093 = vstv %s1092
    %v1094 = vmul.f32 %v950, %v1093
    %v1095 = vmul.f32 %v970, %v1093
    %v1096 = vmul.f32 %v990, %v1093
    %v1097 = vmul.f32 %v1010, %v1093
    %v1098 = vmul.f32 %v1030, %v1093
    %v1099 = vmul.f32 %v1050, %v1093
    %v1100 = vmul.f32 %v1070, %v1093
    %v1101 = vmul.f32 %v1090, %v1093
    %v1110 = vrot.slane %v1095, 6
    %v1111 = vrot.slane %v1096, 4
    %v1112 = vrot.slane %v1097, 2
    %v1113 = vrot.slane %v1099, 6
    %v1114 = vrot.slane %v1100, 4
    %v1115 = vrot.slane %v1101, 2
    %vm1116 = vcmask 1041408
    %v1117 = vsel %vm1116, %v1094, %v1110
    %vm1118 = vcmask 1045508
    %v1119 = vsel %vm1118, %v1111, %v1112
    %vm1120 = vcmask 1043456
    %v1121 = vsel %vm1120, %v1117, %v1119
    %v1122 = vsel %vm1116, %v1098, %v1113
    %v1123 = vsel %vm1118, %v1114, %v1115
    %v1124 = vsel %vm1120, %v1122, %v1123
    %1127 = vst [vmem:[#allocation3] sm:$0xff] %v1121
    %1128 = vst [vmem:[#allocation3 + $0x8] sm:$0xff] %v1124
    // Predicated region
    $region42: #{fnn_forward.1} parent=1 // pred_check
      _
    $region43: #{fnn_forward.1} parent=1 // pred_check_branch
      %1130 = sbr.rel (0) target = $region45
    $region44: #{fnn_forward.1} parent=1 // pred_region
      %1132 = vsyncadd [#allocation4], 0
      %s1134 = sshll.u32 [#allocation3], 4
      %s1135 = int_to_ptr.vmem [resolvable:$true] %s1134
      %s1136 = sshll.u32 %s10, 4
      %s1137 = int_to_ptr.hbm [resolvable:$true] %s1136
      %1139 = dma.vmem_to_hbm [thread:$0]  %s1135, 256, %s1137, [#allocation4]
    $region45: #{fnn_forward.1} parent=1 // pred_fallthru
      _
    // Predicated region
    $region46: #{fnn_forward.1} parent=1 // pred_check
      _
    $region47: #{fnn_forward.1} parent=1 // pred_check_branch
      %1141 = sbr.rel (0) target = $region49
    $region48: #{fnn_forward.1} parent=1 // pred_region
      %1143 = dma.done [#allocation4], 256
    $region49: #{fnn_forward.1} parent=1 // pred_fallthru
      _
    %1144 = vsyncpa [#allocation4], 1

</llo_original>
